<compile_context>
chip_gen: v6e
topology: v6e:2x2x1
jax: 0.10.0
libtpu: 0.0.40
codegen_flags: <defaults>
</compile_context>

<pallas_src>
import jax
import jax.numpy as jnp
from jax.experimental import pallas as pl
from jax.experimental.pallas import tpu as pltpu


def _round_up(a, b):
    return (a + b - 1) // b * b


def _cdiv(a, b):
    return -(-a // b)


# ----------------------------------------------------------------------------
# Kernel
# ----------------------------------------------------------------------------
def _residual_kernel(x_ref, w1_ref, b1_ref, w2_ref, b2_ref, o_ref):
    # x_ref: (tm, C); w*_ref: (C, C); b*_ref: (1, C); o_ref: (tm, C)
    x = x_ref[...]                                   # native dtype -> MXU directly

    h = jnp.dot(x, w1_ref[...], preferred_element_type=jnp.float32)
    h = jnp.maximum(h + b1_ref[...], 0.0)            # Linear1 bias + ReLU (f32)

    # Second matmul: operands in the weight dtype (no-op for f32 weights),
    # f32 accumulation on the MXU.
    y = jnp.dot(h.astype(w2_ref.dtype), w2_ref[...],
                preferred_element_type=jnp.float32)
    y = y + b2_ref[...]

    # Residual add + final ReLU epilogue; store in output dtype.
    o_ref[...] = jnp.maximum(x.astype(jnp.float32) + y, 0.0).astype(o_ref.dtype)


# ----------------------------------------------------------------------------
# Device-aware sizing helpers
# ----------------------------------------------------------------------------
def _tpu_params():
    """Best-effort (VMEM capacity bytes, TensorCores per device)."""
    vmem_cap = 64 * 1024 * 1024          # conservative default (v7x: 64 MiB)
    num_cores = 1                        # v5e / v6e: a single TensorCore
    try:
        vmem_cap = int(pltpu.get_tpu_info().vmem_capacity_bytes)
    except Exception:
        pass
    try:
        num_cores = max(1, int(getattr(jax.devices()[0], "num_cores", 1)))
    except Exception:
        pass
    return vmem_cap, num_cores


def _vmem_requirement(tm, C, x_item, w_item, weight_buffers):
    """Rough per-call VMEM need (lane/sublane padded), plus compiler headroom."""
    Cl = _round_up(C, 128)
    tmu = _round_up(tm, 8)
    return int(
        2 * tmu * Cl * x_item                     # x tiles (double-buffered)
        + 2 * tmu * Cl * x_item                   # out tiles (double-buffered)
        + weight_buffers * 2 * Cl * Cl * w_item   # W1 + W2 (resident)
        + weight_buffers * 2 * 8 * Cl * w_item    # b1 + b2 (sublane-padded)
        + 2 * tmu * Cl * 4                        # f32 intermediates h, y
        + (4 << 20)                               # headroom
    )


def _pick_tm(M, C, x_item, w_item, weight_buffers, vmem_cap, num_cores):
    """VMEM- and core-count-aware row-tile selection."""
    Cl = _round_up(C, 128)
    Ml = _round_up(M, 8)
    if Ml <= 256:
        return Ml                                  # whole problem in one tile

    weight_bytes = weight_buffers * 2 * (Cl * Cl + 8 * Cl) * w_item
    per_row = (2 + 2) * Cl * x_item + 2 * Cl * 4   # x/out double-buffered + f32 h,y
    budget = int(vmem_cap * 0.85) - weight_bytes - (2 << 20)
    tm_cap = budget // per_row if budget > 0 else 256
    tm_cap = max(256, min(1024, tm_cap))
    tm_cap = (tm_cap // 8) * 8

    candidates = [t for t in (1024, 768, 512, 384, 256) if t <= tm_cap] or [256]
    # Only force >=2 grid steps when there are >=2 TensorCores to feed.
    min_steps = 2 if (num_cores >= 2 and M >= 2 * candidates[-1]) else 1

    # Prefer an exact divisor of M (no row padding) with enough steps.
    for t in candidates:
        if M % t == 0 and M // t >= min_steps:
            return t
    # Otherwise minimize total padded rows; ties -> larger tile. Padding a
    # partial tile is far cheaper than a long grid of tiny tiles.
    return min(candidates, key=lambda t: (_cdiv(Ml, t) * t, -t))


# ----------------------------------------------------------------------------
# Wrapper
# ----------------------------------------------------------------------------
def residual_layer(x, w1, b1, w2, b2, *, tm=None):
    """ResidualLayer forward.

    x: (..., C) channels-last activations.
    w1, w2: (C, C) weights stored as (in, out)  (i.e. torch weight transposed).
    b1, b2: (C,) biases.
    """
    orig_shape = x.shape
    C = orig_shape[-1]
    in_dtype = x.dtype
    x_item = jnp.dtype(in_dtype).itemsize
    w_item = jnp.dtype(w1.dtype).itemsize

    x2d = x.reshape(-1, C)
    M = x2d.shape[0]

    vmem_cap, num_cores = _tpu_params()

    # Resident weights (constant index_map): single-buffer once big enough to
    # matter; extra buffers for them are pure VMEM waste.
    single_buffer_weights = (2 * 2 * C * C * w_item) >= (8 << 20)
    weight_buffers = 1 if single_buffer_weights else 2
    # TODO(synk): for very large C (resident CxC weights approaching the VMEM
    # budget, esp. v7x 64 MiB) add an output-channel grid axis with a
    # K-accumulation loop instead of keeping both full weights resident.

    if tm is None:
        tm = _pick_tm(M, C, x_item, w_item, weight_buffers, vmem_cap, num_cores)

    # Row padding only when strictly necessary (partial tile beats tiny tiles).
    pad_rows = (-M) % tm
    if pad_rows:
        x2d = jnp.pad(x2d, ((0, pad_rows), (0, 0)))
    Mp = x2d.shape[0]
    grid = (Mp // tm,)

    b1r = b1.reshape(1, C)
    b2r = b2.reshape(1, C)

    # Generation-aware VMEM limit: >= requirement, <= capacity minus headroom.
    vmem_req = _vmem_requirement(tm, C, x_item, w_item, weight_buffers)
    vmem_limit = max(vmem_req, 16 << 20)
    vmem_limit = min(vmem_limit, max(vmem_cap - (4 << 20), vmem_req))
    vmem_limit = min(vmem_limit, 128 << 20)

    w_kwargs = {"pipeline_mode": pl.Buffered(1)} if single_buffer_weights else {}

    try:
        cost = pl.CostEstimate(
            flops=int(4 * Mp * C * C + 4 * Mp * C),
            transcendentals=0,
            bytes_accessed=int(2 * Mp * C * x_item + 2 * C * C * w_item
                               + 2 * C * w_item),
        )
    except Exception:
        cost = None

    out = pl.pallas_call(
        _residual_kernel,
        out_shape=jax.ShapeDtypeStruct((Mp, C), in_dtype),
        grid_spec=pltpu.PrefetchScalarGridSpec(
            num_scalar_prefetch=0,
            grid=grid,
            in_specs=[
                pl.BlockSpec((tm, C), lambda i: (i, 0)),              # x row tile
                pl.BlockSpec((C, C), lambda i: (0, 0), **w_kwargs),   # W1 (resident)
                pl.BlockSpec((1, C), lambda i: (0, 0), **w_kwargs),   # b1
                pl.BlockSpec((C, C), lambda i: (0, 0), **w_kwargs),   # W2 (resident)
                pl.BlockSpec((1, C), lambda i: (0, 0), **w_kwargs),   # b2
            ],
            out_specs=pl.BlockSpec((tm, C), lambda i: (i, 0)),
        ),
        compiler_params=pltpu.CompilerParams(
            dimension_semantics=("parallel",),
            vmem_limit_bytes=int(vmem_limit),
        ),
        cost_estimate=cost,
    )(x2d, w1, b1r, w2, b2r)

    if pad_rows:
        out = out[:M]
    return out.reshape(orig_shape)


# ----------------------------------------------------------------------------
# Reference + demo
# ----------------------------------------------------------------------------
def _reference(x, w1, b1, w2, b2):
    # HIGHEST precision -> true-f32 reference; the kernel accumulates in f32
    # on the MXU, but default-precision operand handling may differ slightly,
    # hence the modest tolerance in the check below.
    prec = jax.lax.Precision.HIGHEST
    h = jnp.maximum(jnp.dot(x, w1, precision=prec) + b1, 0.0)
    y = jnp.dot(h, w2, precision=prec) + b2
    return jnp.maximum(x + y, 0.0)


if __name__ == "__main__":
    key = jax.random.PRNGKey(0)
    channels = 32
    batch, H, W = 2, 16, 16  # small channels-last spatial input

    k_x, k_w1, k_b1, k_w2, k_b2 = jax.random.split(key, 5)
    x = jax.random.normal(k_x, (batch, H, W, channels), dtype=jnp.float32)

    # PyTorch nn.Linear stores weight as (out, in); we keep weights already
    # transposed to (in, out) so the kernel computes x @ W.
    scale = 1.0 / jnp.sqrt(channels)
    w1 = jax.random.uniform(k_w1, (channels, channels), jnp.float32, -scale, scale)
    b1 = jax.random.uniform(k_b1, (channels,), jnp.float32, -scale, scale)
    w2 = jax.random.uniform(k_w2, (channels, channels), jnp.float32, -scale, scale)
    b2 = jax.random.uniform(k_b2, (channels,), jnp.float32, -scale, scale)

    out = residual_layer(x, w1, b1, w2, b2)
    out = jax.block_until_ready(out)

    ref = _reference(x, w1, b1, w2, b2)
    assert out.shape == x.shape
    # Tolerance documents TPU MXU default-precision operand handling (bf16
    # multiplies, f32 accumulation) vs. the HIGHEST-precision reference.
    assert jnp.allclose(out, ref, atol=2e-2, rtol=2e-2), "mismatch vs reference"

    print("KERNEL_OK")
</pallas_src>

<mosaic_0001>
module attributes {stable_mosaic.version = 11 : i64} {
  func.func @_residual_kernel(%arg0: i32, %arg1: memref<512x32xf32, #tpu.memory_space<vmem>>, %arg2: memref<32x32xf32, #tpu.memory_space<vmem>>, %arg3: memref<1x32xf32, #tpu.memory_space<vmem>>, %arg4: memref<32x32xf32, #tpu.memory_space<vmem>>, %arg5: memref<1x32xf32, #tpu.memory_space<vmem>>, %arg6: memref<512x32xf32, #tpu.memory_space<vmem>>) attributes {dimension_semantics = [#tpu.dimension_semantics<parallel>], iteration_bounds = array<i64: 1>, scalar_prefetch = 0 : i64, scratch_operands = 0 : i64, tpu.core_type = #tpu.core_type<tc>, window_params = [{transform_indices = @transform_0, window_bounds = array<i64: 512, 32>}, {pipeline_mode = #tpu.pipeline_mode<synchronous>, transform_indices = @transform_1, window_bounds = array<i64: 32, 32>}, {pipeline_mode = #tpu.pipeline_mode<synchronous>, transform_indices = @transform_2, window_bounds = array<i64: 1, 32>}, {pipeline_mode = #tpu.pipeline_mode<synchronous>, transform_indices = @transform_3, window_bounds = array<i64: 32, 32>}, {pipeline_mode = #tpu.pipeline_mode<synchronous>, transform_indices = @transform_4, window_bounds = array<i64: 1, 32>}, {transform_indices = @transform_5, window_bounds = array<i64: 512, 32>}]} {
    %c0 = arith.constant 0 : index
    %c0_0 = arith.constant 0 : index
    %0 = vector.load %arg1[%c0, %c0_0] : memref<512x32xf32, #tpu.memory_space<vmem>>, vector<512x32xf32>
    %c0_1 = arith.constant 0 : index
    %c0_2 = arith.constant 0 : index
    %1 = vector.load %arg2[%c0_1, %c0_2] : memref<32x32xf32, #tpu.memory_space<vmem>>, vector<32x32xf32>
    %cst = arith.constant dense<0.000000e+00> : vector<512x32xf32>
    %2 = tpu.matmul %0, %1, %cst {dimension_numbers = #tpu.dot_dimension_numbers<[1], [0], [0], [1], [0, 0, 1, 1], [], []>} : vector<512x32xf32>, vector<32x32xf32>, vector<512x32xf32> -> vector<512x32xf32>
    %c0_3 = arith.constant 0 : index
    %c0_4 = arith.constant 0 : index
    %3 = vector.load %arg3[%c0_3, %c0_4] : memref<1x32xf32, #tpu.memory_space<vmem>>, vector<1x32xf32>
    %4 = vector.broadcast %3 : vector<1x32xf32> to vector<512x32xf32>
    %5 = arith.addf %2, %4 : vector<512x32xf32>
    %cst_5 = arith.constant 0.000000e+00 : f32
    %6 = vector.broadcast %cst_5 : f32 to vector<512x32xf32>
    %7 = arith.maximumf %5, %6 : vector<512x32xf32>
    %c0_6 = arith.constant 0 : index
    %c0_7 = arith.constant 0 : index
    %8 = vector.load %arg4[%c0_6, %c0_7] : memref<32x32xf32, #tpu.memory_space<vmem>>, vector<32x32xf32>
    %cst_8 = arith.constant dense<0.000000e+00> : vector<512x32xf32>
    %9 = tpu.matmul %7, %8, %cst_8 {dimension_numbers = #tpu.dot_dimension_numbers<[1], [0], [0], [1], [0, 0, 1, 1], [], []>} : vector<512x32xf32>, vector<32x32xf32>, vector<512x32xf32> -> vector<512x32xf32>
    %c0_9 = arith.constant 0 : index
    %c0_10 = arith.constant 0 : index
    %10 = vector.load %arg5[%c0_9, %c0_10] : memref<1x32xf32, #tpu.memory_space<vmem>>, vector<1x32xf32>
    %11 = vector.broadcast %10 : vector<1x32xf32> to vector<512x32xf32>
    %12 = arith.addf %9, %11 : vector<512x32xf32>
    %13 = arith.addf %0, %12 : vector<512x32xf32>
    %cst_11 = arith.constant 0.000000e+00 : f32
    %14 = vector.broadcast %cst_11 : f32 to vector<512x32xf32>
    %15 = arith.maximumf %13, %14 : vector<512x32xf32>
    %c0_12 = arith.constant 0 : index
    %c0_13 = arith.constant 0 : index
    %16 = vector.load %arg6[%c0_12, %c0_13] : memref<512x32xf32, #tpu.memory_space<vmem>>, vector<512x32xf32>
    tpu.vector_store %arg6[%c0_12, %c0_13], %15 {strides = array<i32>} : memref<512x32xf32, #tpu.memory_space<vmem>>, vector<512x32xf32>,
    return
  }
  func.func @transform_0(%arg0: i32) -> (i32, i32) {
    %c0_i32 = arith.constant 0 : i32
    %c0_i32_0 = arith.constant 0 : i32
    return %arg0, %c0_i32 : i32, i32
  }
  func.func @transform_1(%arg0: i32) -> (i32, i32) {
    %c0_i32 = arith.constant 0 : i32
    %c0_i32_0 = arith.constant 0 : i32
    %c0_i32_1 = arith.constant 0 : i32
    return %c0_i32, %c0_i32_0 : i32, i32
  }
  func.func @transform_2(%arg0: i32) -> (i32, i32) {
    %c0_i32 = arith.constant 0 : i32
    %c0_i32_0 = arith.constant 0 : i32
    %c0_i32_1 = arith.constant 0 : i32
    return %c0_i32, %c0_i32_0 : i32, i32
  }
  func.func @transform_3(%arg0: i32) -> (i32, i32) {
    %c0_i32 = arith.constant 0 : i32
    %c0_i32_0 = arith.constant 0 : i32
    %c0_i32_1 = arith.constant 0 : i32
    return %c0_i32, %c0_i32_0 : i32, i32
  }
  func.func @transform_4(%arg0: i32) -> (i32, i32) {
    %c0_i32 = arith.constant 0 : i32
    %c0_i32_0 = arith.constant 0 : i32
    %c0_i32_1 = arith.constant 0 : i32
    return %c0_i32, %c0_i32_0 : i32, i32
  }
  func.func @transform_5(%arg0: i32) -> (i32, i32) {
    %c0_i32 = arith.constant 0 : i32
    %c0_i32_0 = arith.constant 0 : i32
    return %arg0, %c0_i32 : i32, i32
  }
}

</mosaic_0001>

<llo_original>
// kernel: tpu_custom_call.1
$region0: #{tpu_custom_call.1}
  #allocation0 [shape = 'u32[]', space=smem, size = 0x4, offset = 0x4, fixed_abs, tag = 'smem constant byte address 0x4 - core index']
  #allocation1 [shape = 'u32[144,128]{1,0:T(1,128)}', space=vmem, size = 0x12000, scoped, tag = 'internal scratch']
  %s0 = inlined_call_operand.vmem [shape: f32[512,32], index: 0, kind: input, shape index: {}]
  %s1 = inlined_call_operand.vmem [shape: f32[32,32], index: 1, kind: input, shape index: {}]
  %s2 = inlined_call_operand.vmem [shape: f32[1,32], index: 2, kind: input, shape index: {}]
  %s3 = inlined_call_operand.vmem [shape: f32[32,32], index: 3, kind: input, shape index: {}]
  %s4 = inlined_call_operand.vmem [shape: f32[1,32], index: 4, kind: input, shape index: {}]
  %s5 = inlined_call_operand.vmem [shape: f32[512,32], index: 5, kind: output, shape index: {}]
  %s6 = sld [smem:[#allocation0]]
  $region30: #{tpu_custom_call.1} parent=0
    _
  %s8 = ssub.s32 1, %s6
  %s9 = scalar_select 0, %s8, %s6
  // Predicated region
  $region2: #{tpu_custom_call.1} parent=0 // pred_check
    _
  $region3: #{tpu_custom_call.1} parent=0 // pred_check_branch
    %11 = sbr.rel (0) target = $region5
  $region4: #{tpu_custom_call.1} parent=0 // pred_region
    _
  $region5: #{tpu_custom_call.1} parent=0 // pred_fallthru
    _
  // Predicated region
  $region6: #{tpu_custom_call.1} parent=0 // pred_check
    _
  $region7: #{tpu_custom_call.1} parent=0 // pred_check_branch
    %13 = sbr.rel (0) target = $region9
  $region8: #{tpu_custom_call.1} parent=0 // pred_region
    _
  $region9: #{tpu_custom_call.1} parent=0 // pred_fallthru
    _
  // Predicated region
  $region10: #{tpu_custom_call.1} parent=0 // pred_check
    _
  $region11: #{tpu_custom_call.1} parent=0 // pred_check_branch
    %15 = sbr.rel (0) target = $region13
  $region12: #{tpu_custom_call.1} parent=0 // pred_region
    _
  $region13: #{tpu_custom_call.1} parent=0 // pred_fallthru
    _
  // Predicated region
  $region14: #{tpu_custom_call.1} parent=0 // pred_check
    _
  $region15: #{tpu_custom_call.1} parent=0 // pred_check_branch
    %17 = sbr.rel (0) target = $region17
  $region16: #{tpu_custom_call.1} parent=0 // pred_region
    _
  $region17: #{tpu_custom_call.1} parent=0 // pred_fallthru
    _
  // Predicated region
  $region18: #{tpu_custom_call.1} parent=0 // pred_check
    _
  $region19: #{tpu_custom_call.1} parent=0 // pred_check_branch
    %19 = sbr.rel (0) target = $region21
  $region20: #{tpu_custom_call.1} parent=0 // pred_region
    _
  $region21: #{tpu_custom_call.1} parent=0 // pred_fallthru
    _
  %v20 = vld [vmem:[%s0] sm:$0xff]
  %v21 = vld [vmem:[%s0 + $0x8] sm:$0xff]
  %v22 = vld [vmem:[%s0 + $0x10] sm:$0xff]
  %v23 = vld [vmem:[%s0 + $0x18] sm:$0xff]
  %v24 = vld [vmem:[%s0 + $0x20] sm:$0xff]
  %v25 = vld [vmem:[%s0 + $0x28] sm:$0xff]
  %v26 = vld [vmem:[%s0 + $0x30] sm:$0xff]
  %v27 = vld [vmem:[%s0 + $0x38] sm:$0xff]
  %v28 = vld [vmem:[%s0 + $0x40] sm:$0xff]
  %v29 = vld [vmem:[%s0 + $0x48] sm:$0xff]
  %v30 = vld [vmem:[%s0 + $0x50] sm:$0xff]
  %v31 = vld [vmem:[%s0 + $0x58] sm:$0xff]
  %v32 = vld [vmem:[%s0 + $0x60] sm:$0xff]
  %v33 = vld [vmem:[%s0 + $0x68] sm:$0xff]
  %v34 = vld [vmem:[%s0 + $0x70] sm:$0xff]
  %v35 = vld [vmem:[%s0 + $0x78] sm:$0xff]
  %v36 = vld [vmem:[%s0 + $0x80] sm:$0xff]
  %v37 = vld [vmem:[%s0 + $0x88] sm:$0xff]
  %v38 = vld [vmem:[%s0 + $0x90] sm:$0xff]
  %v39 = vld [vmem:[%s0 + $0x98] sm:$0xff]
  %v40 = vld [vmem:[%s0 + $0xa0] sm:$0xff]
  %v41 = vld [vmem:[%s0 + $0xa8] sm:$0xff]
  %v42 = vld [vmem:[%s0 + $0xb0] sm:$0xff]
  %v43 = vld [vmem:[%s0 + $0xb8] sm:$0xff]
  %v44 = vld [vmem:[%s0 + $0xc0] sm:$0xff]
  %v45 = vld [vmem:[%s0 + $0xc8] sm:$0xff]
  %v46 = vld [vmem:[%s0 + $0xd0] sm:$0xff]
  %v47 = vld [vmem:[%s0 + $0xd8] sm:$0xff]
  %v48 = vld [vmem:[%s0 + $0xe0] sm:$0xff]
  %v49 = vld [vmem:[%s0 + $0xe8] sm:$0xff]
  %v50 = vld [vmem:[%s0 + $0xf0] sm:$0xff]
  %v51 = vld [vmem:[%s0 + $0xf8] sm:$0xff]
  %v52 = vld [vmem:[%s0 + $0x100] sm:$0xff]
  %v53 = vld [vmem:[%s0 + $0x108] sm:$0xff]
  %v54 = vld [vmem:[%s0 + $0x110] sm:$0xff]
  %v55 = vld [vmem:[%s0 + $0x118] sm:$0xff]
  %v56 = vld [vmem:[%s0 + $0x120] sm:$0xff]
  %v57 = vld [vmem:[%s0 + $0x128] sm:$0xff]
  %v58 = vld [vmem:[%s0 + $0x130] sm:$0xff]
  %v59 = vld [vmem:[%s0 + $0x138] sm:$0xff]
  %v60 = vld [vmem:[%s0 + $0x140] sm:$0xff]
  %v61 = vld [vmem:[%s0 + $0x148] sm:$0xff]
  %v62 = vld [vmem:[%s0 + $0x150] sm:$0xff]
  %v63 = vld [vmem:[%s0 + $0x158] sm:$0xff]
  %v64 = vld [vmem:[%s0 + $0x160] sm:$0xff]
  %v65 = vld [vmem:[%s0 + $0x168] sm:$0xff]
  %v66 = vld [vmem:[%s0 + $0x170] sm:$0xff]
  %v67 = vld [vmem:[%s0 + $0x178] sm:$0xff]
  %v68 = vld [vmem:[%s0 + $0x180] sm:$0xff]
  %v69 = vld [vmem:[%s0 + $0x188] sm:$0xff]
  %v70 = vld [vmem:[%s0 + $0x190] sm:$0xff]
  %v71 = vld [vmem:[%s0 + $0x198] sm:$0xff]
  %v72 = vld [vmem:[%s0 + $0x1a0] sm:$0xff]
  %v73 = vld [vmem:[%s0 + $0x1a8] sm:$0xff]
  %v74 = vld [vmem:[%s0 + $0x1b0] sm:$0xff]
  %v75 = vld [vmem:[%s0 + $0x1b8] sm:$0xff]
  %v76 = vld [vmem:[%s0 + $0x1c0] sm:$0xff]
  %v77 = vld [vmem:[%s0 + $0x1c8] sm:$0xff]
  %v78 = vld [vmem:[%s0 + $0x1d0] sm:$0xff]
  %v79 = vld [vmem:[%s0 + $0x1d8] sm:$0xff]
  %v80 = vld [vmem:[%s0 + $0x1e0] sm:$0xff]
  %v81 = vld [vmem:[%s0 + $0x1e8] sm:$0xff]
  %v82 = vld [vmem:[%s0 + $0x1f0] sm:$0xff]
  %v83 = vld [vmem:[%s0 + $0x1f8] sm:$0xff]
  %v84 = vld [vmem:[%s1] sm:$0xff]
  %v85 = vld [vmem:[%s1 + $0x8] sm:$0xff]
  %v86 = vld [vmem:[%s1 + $0x10] sm:$0xff]
  %v87 = vld [vmem:[%s1 + $0x18] sm:$0xff]
  %v88 = vld [vmem:[%s2] sm:$0x1]
  %v90 = vlaneseq
  %v91 = vshrl.u32 %v90, 7
  %v92 = vsub.s32 0, %v91
  %v93 = vrot.slane %v88, %v92
  %vm95 = vcmask 261120
  %v97 = vsel %vm95, %v20, 0
  %v100 = vsel %vm95, %v21, 0
  %v103 = vsel %vm95, %v22, 0
  %v106 = vsel %vm95, %v23, 0
  %v109 = vsel %vm95, %v24, 0
  %v112 = vsel %vm95, %v25, 0
  %v115 = vsel %vm95, %v26, 0
  %v118 = vsel %vm95, %v27, 0
  %v121 = vsel %vm95, %v28, 0
  %v124 = vsel %vm95, %v29, 0
  %v127 = vsel %vm95, %v30, 0
  %v130 = vsel %vm95, %v31, 0
  %v133 = vsel %vm95, %v32, 0
  %v136 = vsel %vm95, %v33, 0
  %v139 = vsel %vm95, %v34, 0
  %v142 = vsel %vm95, %v35, 0
  %v145 = vsel %vm95, %v36, 0
  %v148 = vsel %vm95, %v37, 0
  %v151 = vsel %vm95, %v38, 0
  %v154 = vsel %vm95, %v39, 0
  %v157 = vsel %vm95, %v40, 0
  %v160 = vsel %vm95, %v41, 0
  %v163 = vsel %vm95, %v42, 0
  %v166 = vsel %vm95, %v43, 0
  %v169 = vsel %vm95, %v44, 0
  %v172 = vsel %vm95, %v45, 0
  %v175 = vsel %vm95, %v46, 0
  %v178 = vsel %vm95, %v47, 0
  %v181 = vsel %vm95, %v48, 0
  %v184 = vsel %vm95, %v49, 0
  %v187 = vsel %vm95, %v50, 0
  %v190 = vsel %vm95, %v51, 0
  %v193 = vsel %vm95, %v52, 0
  %v196 = vsel %vm95, %v53, 0
  %v199 = vsel %vm95, %v54, 0
  %v202 = vsel %vm95, %v55, 0
  %v205 = vsel %vm95, %v56, 0
  %v208 = vsel %vm95, %v57, 0
  %v211 = vsel %vm95, %v58, 0
  %v214 = vsel %vm95, %v59, 0
  %v217 = vsel %vm95, %v60, 0
  %v220 = vsel %vm95, %v61, 0
  %v223 = vsel %vm95, %v62, 0
  %v226 = vsel %vm95, %v63, 0
  %v229 = vsel %vm95, %v64, 0
  %v232 = vsel %vm95, %v65, 0
  %v235 = vsel %vm95, %v66, 0
  %v238 = vsel %vm95, %v67, 0
  %v241 = vsel %vm95, %v68, 0
  %v244 = vsel %vm95, %v69, 0
  %v247 = vsel %vm95, %v70, 0
  %v250 = vsel %vm95, %v71, 0
  %v253 = vsel %vm95, %v72, 0
  %v256 = vsel %vm95, %v73, 0
  %v259 = vsel %vm95, %v74, 0
  %v262 = vsel %vm95, %v75, 0
  %v265 = vsel %vm95, %v76, 0
  %v268 = vsel %vm95, %v77, 0
  %v271 = vsel %vm95, %v78, 0
  %v274 = vsel %vm95, %v79, 0
  %v277 = vsel %vm95, %v80, 0
  %v280 = vsel %vm95, %v81, 0
  %v283 = vsel %vm95, %v82, 0
  %v286 = vsel %vm95, %v83, 0
  %288 = vmatprep.subr.mxu0 0.0
  %289 = vmatpush1.msra.mxu0 0.0
  %290 = vmatprep.subr.mxu0 0.0
  %291 = vmatpush1.msra.mxu0 0.0
  %292 = vmatprep.subr.mxu0 0.0
  %293 = vmatpush1.msra.mxu0 0.0
  %294 = vmatprep.subr.mxu0 0.0
  %295 = vmatpush1.msra.mxu0 0.0
  %296 = vmatprep.subr.mxu0 0.0
  %297 = vmatpush1.msra.mxu0 0.0
  %298 = vmatprep.subr.mxu0 0.0
  %299 = vmatpush1.msra.mxu0 0.0
  %300 = vmatprep.subr.mxu0 0.0
  %301 = vmatpush1.msra.mxu0 0.0
  %302 = vmatprep.subr.mxu0 0.0
  %303 = vmatpush1.msra.mxu0 0.0
  %304 = vmatprep.subr.mxu0 0.0
  %305 = vmatpush1.msra.mxu0 0.0
  %306 = vmatprep.subr.mxu0 0.0
  %307 = vmatpush1.msra.mxu0 0.0
  %308 = vmatprep.subr.mxu0 0.0
  %309 = vmatpush1.msra.mxu0 0.0
  %310 = vmatprep.subr.mxu0 0.0
  %311 = vmatpush1.msra.mxu0 0.0
  %312 = vmatprep.subr.mxu0 0.0
  %313 = vmatpush1.msra.mxu0 %v87
  %314 = vmatprep.subr.mxu0 0.0
  %315 = vmatpush1.msra.mxu0 %v86
  %316 = vmatprep.subr.mxu0 0.0
  %317 = vmatpush1.msra.mxu0 %v85
  %318 = vmatprep.subr.mxu0 0.0
  %319 = vmatpush1.msra.mxu0 %v84
  %320 = vmatprep.subr.mxu0 0.0
  %321 = vmatpush2.msra.mxu0 0.0
  %322 = vmatprep.subr.mxu0 0.0
  %323 = vmatpush2.msra.mxu0 0.0
  %324 = vmatprep.subr.mxu0 0.0
  %325 = vmatpush2.msra.mxu0 0.0
  %326 = vmatprep.subr.mxu0 0.0
  %327 = vmatpush2.msra.mxu0 0.0
  %328 = vmatprep.subr.mxu0 0.0
  %329 = vmatpush2.msra.mxu0 0.0
  %330 = vmatprep.subr.mxu0 0.0
  %331 = vmatpush2.msra.mxu0 0.0
  %332 = vmatprep.subr.mxu0 0.0
  %333 = vmatpush2.msra.mxu0 0.0
  %334 = vmatprep.subr.mxu0 0.0
  %335 = vmatpush2.msra.mxu0 0.0
  %336 = vmatprep.subr.mxu0 0.0
  %337 = vmatpush2.msra.mxu0 0.0
  %338 = vmatprep.subr.mxu0 0.0
  %339 = vmatpush2.msra.mxu0 0.0
  %340 = vmatprep.subr.mxu0 0.0
  %341 = vmatpush2.msra.mxu0 0.0
  %342 = vmatprep.subr.mxu0 0.0
  %343 = vmatpush2.msra.mxu0 0.0
  %344 = vmatprep.subr.mxu0 0.0
  %345 = vmatpush2.msra.mxu0 0.0
  %346 = vmatprep.subr.mxu0 0.0
  %347 = vmatpush2.msra.mxu0 0.0
  %348 = vmatprep.subr.mxu0 0.0
  %349 = vmatpush2.msra.mxu0 0.0
  %350 = vmatprep.subr.mxu0 0.0
  %351 = vmatpush2.msra.mxu0 0.0
  %352 = vmatprep.mubr.f32.mxu0 0.0
  %353 = vmatmul.mubr.f32.gmra.mxu0 %v97
  %v354 = vpop.f32.mrf.mxu0
  %v355 = vadd.f32 %v93, %v354
  %v356 = vpop.f32.mrf.mxu0
  %357 = vmatprep.mubr.f32.mxu0 0.0
  %358 = vmatmul.mubr.f32.gmra.mxu0 %v100
  %v359 = vpop.f32.mrf.mxu0
  %v360 = vadd.f32 %v93, %v359
  %v361 = vpop.f32.mrf.mxu0
  %362 = vmatprep.mubr.f32.mxu0 0.0
  %363 = vmatmul.mubr.f32.gmra.mxu0 %v103
  %v364 = vpop.f32.mrf.mxu0
  %v365 = vadd.f32 %v93, %v364
  %v366 = vpop.f32.mrf.mxu0
  %367 = vmatprep.mubr.f32.mxu0 0.0
  %368 = vmatmul.mubr.f32.gmra.mxu0 %v106
  %v369 = vpop.f32.mrf.mxu0
  %v370 = vadd.f32 %v93, %v369
  %v371 = vpop.f32.mrf.mxu0
  %372 = vmatprep.mubr.f32.mxu0 0.0
  %373 = vmatmul.mubr.f32.gmra.mxu0 %v109
  %v374 = vpop.f32.mrf.mxu0
  %v375 = vadd.f32 %v93, %v374
  %v376 = vpop.f32.mrf.mxu0
  %377 = vmatprep.mubr.f32.mxu0 0.0
  %378 = vmatmul.mubr.f32.gmra.mxu0 %v112
  %v379 = vpop.f32.mrf.mxu0
  %v380 = vadd.f32 %v93, %v379
  %v381 = vpop.f32.mrf.mxu0
  %382 = vmatprep.mubr.f32.mxu0 0.0
  %383 = vmatmul.mubr.f32.gmra.mxu0 %v115
  %v384 = vpop.f32.mrf.mxu0
  %v385 = vadd.f32 %v93, %v384
  %v386 = vpop.f32.mrf.mxu0
  %387 = vmatprep.mubr.f32.mxu0 0.0
  %388 = vmatmul.mubr.f32.gmra.mxu0 %v118
  %v389 = vpop.f32.mrf.mxu0
  %v390 = vadd.f32 %v93, %v389
  %v391 = vpop.f32.mrf.mxu0
  %392 = vmatprep.mubr.f32.mxu0 0.0
  %393 = vmatmul.mubr.f32.gmra.mxu0 %v121
  %v394 = vpop.f32.mrf.mxu0
  %v395 = vadd.f32 %v93, %v394
  %v396 = vpop.f32.mrf.mxu0
  %397 = vmatprep.mubr.f32.mxu0 0.0
  %398 = vmatmul.mubr.f32.gmra.mxu0 %v124
  %v399 = vpop.f32.mrf.mxu0
  %v400 = vadd.f32 %v93, %v399
  %v401 = vpop.f32.mrf.mxu0
  %402 = vmatprep.mubr.f32.mxu0 0.0
  %403 = vmatmul.mubr.f32.gmra.mxu0 %v127
  %v404 = vpop.f32.mrf.mxu0
  %v405 = vadd.f32 %v93, %v404
  %v406 = vpop.f32.mrf.mxu0
  %407 = vmatprep.mubr.f32.mxu0 0.0
  %408 = vmatmul.mubr.f32.gmra.mxu0 %v130
  %v409 = vpop.f32.mrf.mxu0
  %v410 = vadd.f32 %v93, %v409
  %v411 = vpop.f32.mrf.mxu0
  %412 = vmatprep.mubr.f32.mxu0 0.0
  %413 = vmatmul.mubr.f32.gmra.mxu0 %v133
  %v414 = vpop.f32.mrf.mxu0
  %v415 = vadd.f32 %v93, %v414
  %v416 = vpop.f32.mrf.mxu0
  %417 = vmatprep.mubr.f32.mxu0 0.0
  %418 = vmatmul.mubr.f32.gmra.mxu0 %v136
  %v419 = vpop.f32.mrf.mxu0
  %v420 = vadd.f32 %v93, %v419
  %v421 = vpop.f32.mrf.mxu0
  %422 = vmatprep.mubr.f32.mxu0 0.0
  %423 = vmatmul.mubr.f32.gmra.mxu0 %v139
  %v424 = vpop.f32.mrf.mxu0
  %v425 = vadd.f32 %v93, %v424
  %v426 = vpop.f32.mrf.mxu0
  %427 = vmatprep.mubr.f32.mxu0 0.0
  %428 = vmatmul.mubr.f32.gmra.mxu0 %v142
  %v429 = vpop.f32.mrf.mxu0
  %v430 = vadd.f32 %v93, %v429
  %v431 = vpop.f32.mrf.mxu0
  %432 = vmatprep.mubr.f32.mxu0 0.0
  %433 = vmatmul.mubr.f32.gmra.mxu0 %v145
  %v434 = vpop.f32.mrf.mxu0
  %v435 = vadd.f32 %v93, %v434
  %v436 = vpop.f32.mrf.mxu0
  %437 = vmatprep.mubr.f32.mxu0 0.0
  %438 = vmatmul.mubr.f32.gmra.mxu0 %v148
  %v439 = vpop.f32.mrf.mxu0
  %v440 = vadd.f32 %v93, %v439
  %v441 = vpop.f32.mrf.mxu0
  %442 = vmatprep.mubr.f32.mxu0 0.0
  %443 = vmatmul.mubr.f32.gmra.mxu0 %v151
  %v444 = vpop.f32.mrf.mxu0
  %v445 = vadd.f32 %v93, %v444
  %v446 = vpop.f32.mrf.mxu0
  %447 = vmatprep.mubr.f32.mxu0 0.0
  %448 = vmatmul.mubr.f32.gmra.mxu0 %v154
  %v449 = vpop.f32.mrf.mxu0
  %v450 = vadd.f32 %v93, %v449
  %v451 = vpop.f32.mrf.mxu0
  %452 = vmatprep.mubr.f32.mxu0 0.0
  %453 = vmatmul.mubr.f32.gmra.mxu0 %v157
  %v454 = vpop.f32.mrf.mxu0
  %v455 = vadd.f32 %v93, %v454
  %v456 = vpop.f32.mrf.mxu0
  %457 = vmatprep.mubr.f32.mxu0 0.0
  %458 = vmatmul.mubr.f32.gmra.mxu0 %v160
  %v459 = vpop.f32.mrf.mxu0
  %v460 = vadd.f32 %v93, %v459
  %v461 = vpop.f32.mrf.mxu0
  %462 = vmatprep.mubr.f32.mxu0 0.0
  %463 = vmatmul.mubr.f32.gmra.mxu0 %v163
  %v464 = vpop.f32.mrf.mxu0
  %v465 = vadd.f32 %v93, %v464
  %v466 = vpop.f32.mrf.mxu0
  %467 = vmatprep.mubr.f32.mxu0 0.0
  %468 = vmatmul.mubr.f32.gmra.mxu0 %v166
  %v469 = vpop.f32.mrf.mxu0
  %v470 = vadd.f32 %v93, %v469
  %v471 = vpop.f32.mrf.mxu0
  %472 = vmatprep.mubr.f32.mxu0 0.0
  %473 = vmatmul.mubr.f32.gmra.mxu0 %v169
  %v474 = vpop.f32.mrf.mxu0
  %v475 = vadd.f32 %v93, %v474
  %v476 = vpop.f32.mrf.mxu0
  %477 = vmatprep.mubr.f32.mxu0 0.0
  %478 = vmatmul.mubr.f32.gmra.mxu0 %v172
  %v479 = vpop.f32.mrf.mxu0
  %v480 = vadd.f32 %v93, %v479
  %v481 = vpop.f32.mrf.mxu0
  %482 = vmatprep.mubr.f32.mxu0 0.0
  %483 = vmatmul.mubr.f32.gmra.mxu0 %v175
  %v484 = vpop.f32.mrf.mxu0
  %v485 = vadd.f32 %v93, %v484
  %v486 = vpop.f32.mrf.mxu0
  %487 = vmatprep.mubr.f32.mxu0 0.0
  %488 = vmatmul.mubr.f32.gmra.mxu0 %v178
  %v489 = vpop.f32.mrf.mxu0
  %v490 = vadd.f32 %v93, %v489
  %v491 = vpop.f32.mrf.mxu0
  %492 = vmatprep.mubr.f32.mxu0 0.0
  %493 = vmatmul.mubr.f32.gmra.mxu0 %v181
  %v494 = vpop.f32.mrf.mxu0
  %v495 = vadd.f32 %v93, %v494
  %v496 = vpop.f32.mrf.mxu0
  %497 = vmatprep.mubr.f32.mxu0 0.0
  %498 = vmatmul.mubr.f32.gmra.mxu0 %v184
  %v499 = vpop.f32.mrf.mxu0
  %v500 = vadd.f32 %v93, %v499
  %v501 = vpop.f32.mrf.mxu0
  %502 = vmatprep.mubr.f32.mxu0 0.0
  %503 = vmatmul.mubr.f32.gmra.mxu0 %v187
  %v504 = vpop.f32.mrf.mxu0
  %v505 = vadd.f32 %v93, %v504
  %v506 = vpop.f32.mrf.mxu0
  %507 = vmatprep.mubr.f32.mxu0 0.0
  %508 = vmatmul.mubr.f32.gmra.mxu0 %v190
  %v509 = vpop.f32.mrf.mxu0
  %v510 = vadd.f32 %v93, %v509
  %v511 = vpop.f32.mrf.mxu0
  %512 = vmatprep.mubr.f32.mxu0 0.0
  %513 = vmatmul.mubr.f32.gmra.mxu0 %v193
  %v514 = vpop.f32.mrf.mxu0
  %v515 = vadd.f32 %v93, %v514
  %v516 = vpop.f32.mrf.mxu0
  %517 = vmatprep.mubr.f32.mxu0 0.0
  %518 = vmatmul.mubr.f32.gmra.mxu0 %v196
  %v519 = vpop.f32.mrf.mxu0
  %v520 = vadd.f32 %v93, %v519
  %v521 = vpop.f32.mrf.mxu0
  %522 = vmatprep.mubr.f32.mxu0 0.0
  %523 = vmatmul.mubr.f32.gmra.mxu0 %v199
  %v524 = vpop.f32.mrf.mxu0
  %v525 = vadd.f32 %v93, %v524
  %v526 = vpop.f32.mrf.mxu0
  %527 = vmatprep.mubr.f32.mxu0 0.0
  %528 = vmatmul.mubr.f32.gmra.mxu0 %v202
  %v529 = vpop.f32.mrf.mxu0
  %v530 = vadd.f32 %v93, %v529
  %v531 = vpop.f32.mrf.mxu0
  %532 = vmatprep.mubr.f32.mxu0 0.0
  %533 = vmatmul.mubr.f32.gmra.mxu0 %v205
  %v534 = vpop.f32.mrf.mxu0
  %v535 = vadd.f32 %v93, %v534
  %v536 = vpop.f32.mrf.mxu0
  %537 = vmatprep.mubr.f32.mxu0 0.0
  %538 = vmatmul.mubr.f32.gmra.mxu0 %v208
  %v539 = vpop.f32.mrf.mxu0
  %v540 = vadd.f32 %v93, %v539
  %v541 = vpop.f32.mrf.mxu0
  %542 = vmatprep.mubr.f32.mxu0 0.0
  %543 = vmatmul.mubr.f32.gmra.mxu0 %v211
  %v544 = vpop.f32.mrf.mxu0
  %v545 = vadd.f32 %v93, %v544
  %v546 = vpop.f32.mrf.mxu0
  %547 = vmatprep.mubr.f32.mxu0 0.0
  %548 = vmatmul.mubr.f32.gmra.mxu0 %v214
  %v549 = vpop.f32.mrf.mxu0
  %v550 = vadd.f32 %v93, %v549
  %v551 = vpop.f32.mrf.mxu0
  %552 = vmatprep.mubr.f32.mxu0 0.0
  %553 = vmatmul.mubr.f32.gmra.mxu0 %v217
  %v554 = vpop.f32.mrf.mxu0
  %v555 = vadd.f32 %v93, %v554
  %v556 = vpop.f32.mrf.mxu0
  %557 = vmatprep.mubr.f32.mxu0 0.0
  %558 = vmatmul.mubr.f32.gmra.mxu0 %v220
  %v559 = vpop.f32.mrf.mxu0
  %v560 = vadd.f32 %v93, %v559
  %v561 = vpop.f32.mrf.mxu0
  %562 = vmatprep.mubr.f32.mxu0 0.0
  %563 = vmatmul.mubr.f32.gmra.mxu0 %v223
  %v564 = vpop.f32.mrf.mxu0
  %v565 = vadd.f32 %v93, %v564
  %v566 = vpop.f32.mrf.mxu0
  %567 = vmatprep.mubr.f32.mxu0 0.0
  %568 = vmatmul.mubr.f32.gmra.mxu0 %v226
  %v569 = vpop.f32.mrf.mxu0
  %v570 = vadd.f32 %v93, %v569
  %v571 = vpop.f32.mrf.mxu0
  %572 = vmatprep.mubr.f32.mxu0 0.0
  %573 = vmatmul.mubr.f32.gmra.mxu0 %v229
  %v574 = vpop.f32.mrf.mxu0
  %v575 = vadd.f32 %v93, %v574
  %v576 = vpop.f32.mrf.mxu0
  %577 = vmatprep.mubr.f32.mxu0 0.0
  %578 = vmatmul.mubr.f32.gmra.mxu0 %v232
  %v579 = vpop.f32.mrf.mxu0
  %v580 = vadd.f32 %v93, %v579
  %v581 = vpop.f32.mrf.mxu0
  %582 = vmatprep.mubr.f32.mxu0 0.0
  %583 = vmatmul.mubr.f32.gmra.mxu0 %v235
  %v584 = vpop.f32.mrf.mxu0
  %v585 = vadd.f32 %v93, %v584
  %v586 = vpop.f32.mrf.mxu0
  %587 = vmatprep.mubr.f32.mxu0 0.0
  %588 = vmatmul.mubr.f32.gmra.mxu0 %v238
  %v589 = vpop.f32.mrf.mxu0
  %v590 = vadd.f32 %v93, %v589
  %v591 = vpop.f32.mrf.mxu0
  %592 = vmatprep.mubr.f32.mxu0 0.0
  %593 = vmatmul.mubr.f32.gmra.mxu0 %v241
  %v594 = vpop.f32.mrf.mxu0
  %v595 = vadd.f32 %v93, %v594
  %v596 = vpop.f32.mrf.mxu0
  %597 = vmatprep.mubr.f32.mxu0 0.0
  %598 = vmatmul.mubr.f32.gmra.mxu0 %v244
  %v599 = vpop.f32.mrf.mxu0
  %v600 = vadd.f32 %v93, %v599
  %v601 = vpop.f32.mrf.mxu0
  %602 = vmatprep.mubr.f32.mxu0 0.0
  %603 = vmatmul.mubr.f32.gmra.mxu0 %v247
  %v604 = vpop.f32.mrf.mxu0
  %v605 = vadd.f32 %v93, %v604
  %v606 = vpop.f32.mrf.mxu0
  %607 = vmatprep.mubr.f32.mxu0 0.0
  %608 = vmatmul.mubr.f32.gmra.mxu0 %v250
  %v609 = vpop.f32.mrf.mxu0
  %v610 = vadd.f32 %v93, %v609
  %v611 = vpop.f32.mrf.mxu0
  %612 = vmatprep.mubr.f32.mxu0 0.0
  %613 = vmatmul.mubr.f32.gmra.mxu0 %v253
  %v614 = vpop.f32.mrf.mxu0
  %v615 = vadd.f32 %v93, %v614
  %v616 = vpop.f32.mrf.mxu0
  %617 = vmatprep.mubr.f32.mxu0 0.0
  %618 = vmatmul.mubr.f32.gmra.mxu0 %v256
  %v619 = vpop.f32.mrf.mxu0
  %v620 = vadd.f32 %v93, %v619
  %v621 = vpop.f32.mrf.mxu0
  %622 = vmatprep.mubr.f32.mxu0 0.0
  %623 = vmatmul.mubr.f32.gmra.mxu0 %v259
  %v624 = vpop.f32.mrf.mxu0
  %v625 = vadd.f32 %v93, %v624
  %v626 = vpop.f32.mrf.mxu0
  %627 = vmatprep.mubr.f32.mxu0 0.0
  %628 = vmatmul.mubr.f32.gmra.mxu0 %v262
  %v629 = vpop.f32.mrf.mxu0
  %v630 = vadd.f32 %v93, %v629
  %v631 = vpop.f32.mrf.mxu0
  %632 = vmatprep.mubr.f32.mxu0 0.0
  %633 = vmatmul.mubr.f32.gmra.mxu0 %v265
  %v634 = vpop.f32.mrf.mxu0
  %v635 = vadd.f32 %v93, %v634
  %v636 = vpop.f32.mrf.mxu0
  %637 = vmatprep.mubr.f32.mxu0 0.0
  %638 = vmatmul.mubr.f32.gmra.mxu0 %v268
  %v639 = vpop.f32.mrf.mxu0
  %v640 = vadd.f32 %v93, %v639
  %v641 = vpop.f32.mrf.mxu0
  %642 = vmatprep.mubr.f32.mxu0 0.0
  %643 = vmatmul.mubr.f32.gmra.mxu0 %v271
  %v644 = vpop.f32.mrf.mxu0
  %v645 = vadd.f32 %v93, %v644
  %v646 = vpop.f32.mrf.mxu0
  %647 = vmatprep.mubr.f32.mxu0 0.0
  %648 = vmatmul.mubr.f32.gmra.mxu0 %v274
  %v649 = vpop.f32.mrf.mxu0
  %v650 = vadd.f32 %v93, %v649
  %v651 = vpop.f32.mrf.mxu0
  %652 = vmatprep.mubr.f32.mxu0 0.0
  %653 = vmatmul.mubr.f32.gmra.mxu0 %v277
  %v654 = vpop.f32.mrf.mxu0
  %v655 = vadd.f32 %v93, %v654
  %v656 = vpop.f32.mrf.mxu0
  %657 = vmatprep.mubr.f32.mxu0 0.0
  %658 = vmatmul.mubr.f32.gmra.mxu0 %v280
  %v659 = vpop.f32.mrf.mxu0
  %v660 = vadd.f32 %v93, %v659
  %v661 = vpop.f32.mrf.mxu0
  %662 = vmatprep.mubr.f32.mxu0 0.0
  %663 = vmatmul.mubr.f32.gmra.mxu0 %v283
  %v664 = vpop.f32.mrf.mxu0
  %v665 = vadd.f32 %v93, %v664
  %v666 = vpop.f32.mrf.mxu0
  %667 = vmatprep.mubr.f32.mxu0 0.0
  %668 = vmatmul.mubr.f32.gmra.mxu0 %v286
  %v669 = vpop.f32.mrf.mxu0
  %v670 = vadd.f32 %v93, %v669
  %v671 = vpop.f32.mrf.mxu0
  %672 = vdwg.mxu0
  %v673 = vmax.f32 %v355, 0.0
  %v674 = vmax.f32 %v360, 0.0
  %v675 = vmax.f32 %v365, 0.0
  %v676 = vmax.f32 %v370, 0.0
  %v677 = vmax.f32 %v375, 0.0
  %v678 = vmax.f32 %v380, 0.0
  %v679 = vmax.f32 %v385, 0.0
  %v680 = vmax.f32 %v390, 0.0
  %v681 = vmax.f32 %v395, 0.0
  %v682 = vmax.f32 %v400, 0.0
  %v683 = vmax.f32 %v405, 0.0
  %v684 = vmax.f32 %v410, 0.0
  %v685 = vmax.f32 %v415, 0.0
  %v686 = vmax.f32 %v420, 0.0
  %v687 = vmax.f32 %v425, 0.0
  %v688 = vmax.f32 %v430, 0.0
  %v689 = vmax.f32 %v435, 0.0
  %v690 = vmax.f32 %v440, 0.0
  %v691 = vmax.f32 %v445, 0.0
  %v692 = vmax.f32 %v450, 0.0
  %v693 = vmax.f32 %v455, 0.0
  %v694 = vmax.f32 %v460, 0.0
  %v695 = vmax.f32 %v465, 0.0
  %v696 = vmax.f32 %v470, 0.0
  %v697 = vmax.f32 %v475, 0.0
  %v698 = vmax.f32 %v480, 0.0
  %v699 = vmax.f32 %v485, 0.0
  %v700 = vmax.f32 %v490, 0.0
  %v701 = vmax.f32 %v495, 0.0
  %v702 = vmax.f32 %v500, 0.0
  %v703 = vmax.f32 %v505, 0.0
  %v704 = vmax.f32 %v510, 0.0
  %v705 = vmax.f32 %v515, 0.0
  %v706 = vmax.f32 %v520, 0.0
  %v707 = vmax.f32 %v525, 0.0
  %v708 = vmax.f32 %v530, 0.0
  %v709 = vmax.f32 %v535, 0.0
  %v710 = vmax.f32 %v540, 0.0
  %v711 = vmax.f32 %v545, 0.0
  %v712 = vmax.f32 %v550, 0.0
  %v713 = vmax.f32 %v555, 0.0
  %v714 = vmax.f32 %v560, 0.0
  %v715 = vmax.f32 %v565, 0.0
  %v716 = vmax.f32 %v570, 0.0
  %v717 = vmax.f32 %v575, 0.0
  %v718 = vmax.f32 %v580, 0.0
  %v719 = vmax.f32 %v585, 0.0
  %v720 = vmax.f32 %v590, 0.0
  %v721 = vmax.f32 %v595, 0.0
  %v722 = vmax.f32 %v600, 0.0
  %v723 = vmax.f32 %v605, 0.0
  %v724 = vmax.f32 %v610, 0.0
  %v725 = vmax.f32 %v615, 0.0
  %v726 = vmax.f32 %v620, 0.0
  %v727 = vmax.f32 %v625, 0.0
  %v728 = vmax.f32 %v630, 0.0
  %v729 = vmax.f32 %v635, 0.0
  %v730 = vmax.f32 %v640, 0.0
  %v731 = vmax.f32 %v645, 0.0
  %v732 = vmax.f32 %v650, 0.0
  %v733 = vmax.f32 %v655, 0.0
  %v734 = vmax.f32 %v660, 0.0
  %v735 = vmax.f32 %v665, 0.0
  %v736 = vmax.f32 %v670, 0.0
  %v737 = vld [vmem:[%s3] sm:$0xff]
  %v738 = vld [vmem:[%s3 + $0x8] sm:$0xff]
  %v739 = vld [vmem:[%s3 + $0x10] sm:$0xff]
  %v740 = vld [vmem:[%s3 + $0x18] sm:$0xff]
  %v741 = vld [vmem:[%s4] sm:$0x1]
  %v743 = vlaneseq
  %v744 = vshrl.u32 %v743, 7
  %v745 = vsub.s32 0, %v744
  %v746 = vrot.slane %v741, %v745
  %v749 = vsel %vm95, %v673, 0
  %v752 = vsel %vm95, %v674, 0
  %v755 = vsel %vm95, %v675, 0
  %v758 = vsel %vm95, %v676, 0
  %v761 = vsel %vm95, %v677, 0
  %v764 = vsel %vm95, %v678, 0
  %v767 = vsel %vm95, %v679, 0
  %v770 = vsel %vm95, %v680, 0
  %v773 = vsel %vm95, %v681, 0
  %v776 = vsel %vm95, %v682, 0
  %v779 = vsel %vm95, %v683, 0
  %v782 = vsel %vm95, %v684, 0
  %v785 = vsel %vm95, %v685, 0
  %v788 = vsel %vm95, %v686, 0
  %v791 = vsel %vm95, %v687, 0
  %v794 = vsel %vm95, %v688, 0
  %v797 = vsel %vm95, %v689, 0
  %v800 = vsel %vm95, %v690, 0
  %v803 = vsel %vm95, %v691, 0
  %v806 = vsel %vm95, %v692, 0
  %v809 = vsel %vm95, %v693, 0
  %v812 = vsel %vm95, %v694, 0
  %v815 = vsel %vm95, %v695, 0
  %v818 = vsel %vm95, %v696, 0
  %v821 = vsel %vm95, %v697, 0
  %v824 = vsel %vm95, %v698, 0
  %v827 = vsel %vm95, %v699, 0
  %v830 = vsel %vm95, %v700, 0
  %v833 = vsel %vm95, %v701, 0
  %v836 = vsel %vm95, %v702, 0
  %v839 = vsel %vm95, %v703, 0
  %v842 = vsel %vm95, %v704, 0
  %v845 = vsel %vm95, %v705, 0
  %v848 = vsel %vm95, %v706, 0
  %v851 = vsel %vm95, %v707, 0
  %v854 = vsel %vm95, %v708, 0
  %v857 = vsel %vm95, %v709, 0
  %v860 = vsel %vm95, %v710, 0
  %v863 = vsel %vm95, %v711, 0
  %v866 = vsel %vm95, %v712, 0
  %v869 = vsel %vm95, %v713, 0
  %v872 = vsel %vm95, %v714, 0
  %v875 = vsel %vm95, %v715, 0
  %v878 = vsel %vm95, %v716, 0
  %v881 = vsel %vm95, %v717, 0
  %v884 = vsel %vm95, %v718, 0
  %v887 = vsel %vm95, %v719, 0
  %v890 = vsel %vm95, %v720, 0
  %v893 = vsel %vm95, %v721, 0
  %v896 = vsel %vm95, %v722, 0
  %v899 = vsel %vm95, %v723, 0
  %v902 = vsel %vm95, %v724, 0
  %v905 = vsel %vm95, %v725, 0
  %v908 = vsel %vm95, %v726, 0
  %v911 = vsel %vm95, %v727, 0
  %v914 = vsel %vm95, %v728, 0
  %v917 = vsel %vm95, %v729, 0
  %v920 = vsel %vm95, %v730, 0
  %v923 = vsel %vm95, %v731, 0
  %v926 = vsel %vm95, %v732, 0
  %v929 = vsel %vm95, %v733, 0
  %v932 = vsel %vm95, %v734, 0
  %v935 = vsel %vm95, %v735, 0
  %v938 = vsel %vm95, %v736, 0
  %940 = vmatprep.subr.mxu0 0.0
  %941 = vmatpush1.msra.mxu0 0.0
  %942 = vmatprep.subr.mxu0 0.0
  %943 = vmatpush1.msra.mxu0 0.0
  %944 = vmatprep.subr.mxu0 0.0
  %945 = vmatpush1.msra.mxu0 0.0
  %946 = vmatprep.subr.mxu0 0.0
  %947 = vmatpush1.msra.mxu0 0.0
  %948 = vmatprep.subr.mxu0 0.0
  %949 = vmatpush1.msra.mxu0 0.0
  %950 = vmatprep.subr.mxu0 0.0
  %951 = vmatpush1.msra.mxu0 0.0
  %952 = vmatprep.subr.mxu0 0.0
  %953 = vmatpush1.msra.mxu0 0.0
  %954 = vmatprep.subr.mxu0 0.0
  %955 = vmatpush1.msra.mxu0 0.0
  %956 = vmatprep.subr.mxu0 0.0
  %957 = vmatpush1.msra.mxu0 0.0
  %958 = vmatprep.subr.mxu0 0.0
  %959 = vmatpush1.msra.mxu0 0.0
  %960 = vmatprep.subr.mxu0 0.0
  %961 = vmatpush1.msra.mxu0 0.0
  %962 = vmatprep.subr.mxu0 0.0
  %963 = vmatpush1.msra.mxu0 0.0
  %964 = vmatprep.subr.mxu0 0.0
  %965 = vmatpush1.msra.mxu0 %v740
  %966 = vmatprep.subr.mxu0 0.0
  %967 = vmatpush1.msra.mxu0 %v739
  %968 = vmatprep.subr.mxu0 0.0
  %969 = vmatpush1.msra.mxu0 %v738
  %970 = vmatprep.subr.mxu0 0.0
  %971 = vmatpush1.msra.mxu0 %v737
  %972 = vmatprep.subr.mxu0 0.0
  %973 = vmatpush2.msra.mxu0 0.0
  %974 = vmatprep.subr.mxu0 0.0
  %975 = vmatpush2.msra.mxu0 0.0
  %976 = vmatprep.subr.mxu0 0.0
  %977 = vmatpush2.msra.mxu0 0.0
  %978 = vmatprep.subr.mxu0 0.0
  %979 = vmatpush2.msra.mxu0 0.0
  %980 = vmatprep.subr.mxu0 0.0
  %981 = vmatpush2.msra.mxu0 0.0
  %982 = vmatprep.subr.mxu0 0.0
  %983 = vmatpush2.msra.mxu0 0.0
  %984 = vmatprep.subr.mxu0 0.0
  %985 = vmatpush2.msra.mxu0 0.0
  %986 = vmatprep.subr.mxu0 0.0
  %987 = vmatpush2.msra.mxu0 0.0
  %988 = vmatprep.subr.mxu0 0.0
  %989 = vmatpush2.msra.mxu0 0.0
  %990 = vmatprep.subr.mxu0 0.0
  %991 = vmatpush2.msra.mxu0 0.0
  %992 = vmatprep.subr.mxu0 0.0
  %993 = vmatpush2.msra.mxu0 0.0
  %994 = vmatprep.subr.mxu0 0.0
  %995 = vmatpush2.msra.mxu0 0.0
  %996 = vmatprep.subr.mxu0 0.0
  %997 = vmatpush2.msra.mxu0 0.0
  %998 = vmatprep.subr.mxu0 0.0
  %999 = vmatpush2.msra.mxu0 0.0
  %1000 = vmatprep.subr.mxu0 0.0
  %1001 = vmatpush2.msra.mxu0 0.0
  %1002 = vmatprep.subr.mxu0 0.0
  %1003 = vmatpush2.msra.mxu0 0.0
  %1004 = vmatprep.mubr.f32.mxu0 0.0
  %1005 = vmatmul.mubr.f32.gmra.mxu0 %v749
  %v1006 = vpop.f32.mrf.mxu0
  %v1007 = vadd.f32 %v746, %v1006
  %v1008 = vpop.f32.mrf.mxu0
  %1009 = vmatprep.mubr.f32.mxu0 0.0
  %1010 = vmatmul.mubr.f32.gmra.mxu0 %v752
  %v1011 = vpop.f32.mrf.mxu0
  %v1012 = vadd.f32 %v746, %v1011
  %v1013 = vpop.f32.mrf.mxu0
  %1014 = vmatprep.mubr.f32.mxu0 0.0
  %1015 = vmatmul.mubr.f32.gmra.mxu0 %v755
  %v1016 = vpop.f32.mrf.mxu0
  %v1017 = vadd.f32 %v746, %v1016
  %v1018 = vpop.f32.mrf.mxu0
  %1019 = vmatprep.mubr.f32.mxu0 0.0
  %1020 = vmatmul.mubr.f32.gmra.mxu0 %v758
  %v1021 = vpop.f32.mrf.mxu0
  %v1022 = vadd.f32 %v746, %v1021
  %v1023 = vpop.f32.mrf.mxu0
  %1024 = vmatprep.mubr.f32.mxu0 0.0
  %1025 = vmatmul.mubr.f32.gmra.mxu0 %v761
  %v1026 = vpop.f32.mrf.mxu0
  %v1027 = vadd.f32 %v746, %v1026
  %v1028 = vpop.f32.mrf.mxu0
  %1029 = vmatprep.mubr.f32.mxu0 0.0
  %1030 = vmatmul.mubr.f32.gmra.mxu0 %v764
  %v1031 = vpop.f32.mrf.mxu0
  %v1032 = vadd.f32 %v746, %v1031
  %v1033 = vpop.f32.mrf.mxu0
  %1034 = vmatprep.mubr.f32.mxu0 0.0
  %1035 = vmatmul.mubr.f32.gmra.mxu0 %v767
  %v1036 = vpop.f32.mrf.mxu0
  %v1037 = vadd.f32 %v746, %v1036
  %v1038 = vpop.f32.mrf.mxu0
  %1039 = vmatprep.mubr.f32.mxu0 0.0
  %1040 = vmatmul.mubr.f32.gmra.mxu0 %v770
  %v1041 = vpop.f32.mrf.mxu0
  %v1042 = vadd.f32 %v746, %v1041
  %v1043 = vpop.f32.mrf.mxu0
  %1044 = vmatprep.mubr.f32.mxu0 0.0
  %1045 = vmatmul.mubr.f32.gmra.mxu0 %v773
  %v1046 = vpop.f32.mrf.mxu0
  %v1047 = vadd.f32 %v746, %v1046
  %v1048 = vpop.f32.mrf.mxu0
  %1049 = vmatprep.mubr.f32.mxu0 0.0
  %1050 = vmatmul.mubr.f32.gmra.mxu0 %v776
  %v1051 = vpop.f32.mrf.mxu0
  %v1052 = vadd.f32 %v746, %v1051
  %v1053 = vpop.f32.mrf.mxu0
  %1054 = vmatprep.mubr.f32.mxu0 0.0
  %1055 = vmatmul.mubr.f32.gmra.mxu0 %v779
  %v1056 = vpop.f32.mrf.mxu0
  %v1057 = vadd.f32 %v746, %v1056
  %v1058 = vpop.f32.mrf.mxu0
  %1059 = vmatprep.mubr.f32.mxu0 0.0
  %1060 = vmatmul.mubr.f32.gmra.mxu0 %v782
  %v1061 = vpop.f32.mrf.mxu0
  %v1062 = vadd.f32 %v746, %v1061
  %v1063 = vpop.f32.mrf.mxu0
  %1064 = vmatprep.mubr.f32.mxu0 0.0
  %1065 = vmatmul.mubr.f32.gmra.mxu0 %v785
  %v1066 = vpop.f32.mrf.mxu0
  %v1067 = vadd.f32 %v746, %v1066
  %v1068 = vpop.f32.mrf.mxu0
  %1069 = vmatprep.mubr.f32.mxu0 0.0
  %1070 = vmatmul.mubr.f32.gmra.mxu0 %v788
  %v1071 = vpop.f32.mrf.mxu0
  %v1072 = vadd.f32 %v746, %v1071
  %v1073 = vpop.f32.mrf.mxu0
  %1074 = vmatprep.mubr.f32.mxu0 0.0
  %1075 = vmatmul.mubr.f32.gmra.mxu0 %v791
  %v1076 = vpop.f32.mrf.mxu0
  %v1077 = vadd.f32 %v746, %v1076
  %v1078 = vpop.f32.mrf.mxu0
  %1079 = vmatprep.mubr.f32.mxu0 0.0
  %1080 = vmatmul.mubr.f32.gmra.mxu0 %v794
  %v1081 = vpop.f32.mrf.mxu0
  %v1082 = vadd.f32 %v746, %v1081
  %v1083 = vpop.f32.mrf.mxu0
  %1084 = vmatprep.mubr.f32.mxu0 0.0
  %1085 = vmatmul.mubr.f32.gmra.mxu0 %v797
  %v1086 = vpop.f32.mrf.mxu0
  %v1087 = vadd.f32 %v746, %v1086
  %v1088 = vpop.f32.mrf.mxu0
  %1089 = vmatprep.mubr.f32.mxu0 0.0
  %1090 = vmatmul.mubr.f32.gmra.mxu0 %v800
  %v1091 = vpop.f32.mrf.mxu0
  %v1092 = vadd.f32 %v746, %v1091
  %v1093 = vpop.f32.mrf.mxu0
  %1094 = vmatprep.mubr.f32.mxu0 0.0
  %1095 = vmatmul.mubr.f32.gmra.mxu0 %v803
  %v1096 = vpop.f32.mrf.mxu0
  %v1097 = vadd.f32 %v746, %v1096
  %v1098 = vpop.f32.mrf.mxu0
  %1099 = vmatprep.mubr.f32.mxu0 0.0
  %1100 = vmatmul.mubr.f32.gmra.mxu0 %v806
  %v1101 = vpop.f32.mrf.mxu0
  %v1102 = vadd.f32 %v746, %v1101
  %v1103 = vpop.f32.mrf.mxu0
  %1104 = vmatprep.mubr.f32.mxu0 0.0
  %1105 = vmatmul.mubr.f32.gmra.mxu0 %v809
  %v1106 = vpop.f32.mrf.mxu0
  %v1107 = vadd.f32 %v746, %v1106
  %v1108 = vpop.f32.mrf.mxu0
  %1109 = vmatprep.mubr.f32.mxu0 0.0
  %1110 = vmatmul.mubr.f32.gmra.mxu0 %v812
  %v1111 = vpop.f32.mrf.mxu0
  %v1112 = vadd.f32 %v746, %v1111
  %v1113 = vpop.f32.mrf.mxu0
  %1114 = vmatprep.mubr.f32.mxu0 0.0
  %1115 = vmatmul.mubr.f32.gmra.mxu0 %v815
  %v1116 = vpop.f32.mrf.mxu0
  %v1117 = vadd.f32 %v746, %v1116
  %v1118 = vpop.f32.mrf.mxu0
  %1119 = vmatprep.mubr.f32.mxu0 0.0
  %1120 = vmatmul.mubr.f32.gmra.mxu0 %v818
  %v1121 = vpop.f32.mrf.mxu0
  %v1122 = vadd.f32 %v746, %v1121
  %v1123 = vpop.f32.mrf.mxu0
  %1124 = vmatprep.mubr.f32.mxu0 0.0
  %1125 = vmatmul.mubr.f32.gmra.mxu0 %v821
  %v1126 = vpop.f32.mrf.mxu0
  %v1127 = vadd.f32 %v746, %v1126
  %v1128 = vpop.f32.mrf.mxu0
  %1129 = vmatprep.mubr.f32.mxu0 0.0
  %1130 = vmatmul.mubr.f32.gmra.mxu0 %v824
  %v1131 = vpop.f32.mrf.mxu0
  %v1132 = vadd.f32 %v746, %v1131
  %v1133 = vpop.f32.mrf.mxu0
  %1134 = vmatprep.mubr.f32.mxu0 0.0
  %1135 = vmatmul.mubr.f32.gmra.mxu0 %v827
  %v1136 = vpop.f32.mrf.mxu0
  %v1137 = vadd.f32 %v746, %v1136
  %v1138 = vpop.f32.mrf.mxu0
  %1139 = vmatprep.mubr.f32.mxu0 0.0
  %1140 = vmatmul.mubr.f32.gmra.mxu0 %v830
  %v1141 = vpop.f32.mrf.mxu0
  %v1142 = vadd.f32 %v746, %v1141
  %v1143 = vpop.f32.mrf.mxu0
  %1144 = vmatprep.mubr.f32.mxu0 0.0
  %1145 = vmatmul.mubr.f32.gmra.mxu0 %v833
  %v1146 = vpop.f32.mrf.mxu0
  %v1147 = vadd.f32 %v746, %v1146
  %v1148 = vpop.f32.mrf.mxu0
  %1149 = vmatprep.mubr.f32.mxu0 0.0
  %1150 = vmatmul.mubr.f32.gmra.mxu0 %v836
  %v1151 = vpop.f32.mrf.mxu0
  %v1152 = vadd.f32 %v746, %v1151
  %v1153 = vpop.f32.mrf.mxu0
  %1154 = vmatprep.mubr.f32.mxu0 0.0
  %1155 = vmatmul.mubr.f32.gmra.mxu0 %v839
  %v1156 = vpop.f32.mrf.mxu0
  %v1157 = vadd.f32 %v746, %v1156
  %v1158 = vpop.f32.mrf.mxu0
  %1159 = vmatprep.mubr.f32.mxu0 0.0
  %1160 = vmatmul.mubr.f32.gmra.mxu0 %v842
  %v1161 = vpop.f32.mrf.mxu0
  %v1162 = vadd.f32 %v746, %v1161
  %v1163 = vpop.f32.mrf.mxu0
  %1164 = vmatprep.mubr.f32.mxu0 0.0
  %1165 = vmatmul.mubr.f32.gmra.mxu0 %v845
  %v1166 = vpop.f32.mrf.mxu0
  %v1167 = vadd.f32 %v746, %v1166
  %v1168 = vpop.f32.mrf.mxu0
  %1169 = vmatprep.mubr.f32.mxu0 0.0
  %1170 = vmatmul.mubr.f32.gmra.mxu0 %v848
  %v1171 = vpop.f32.mrf.mxu0
  %v1172 = vadd.f32 %v746, %v1171
  %v1173 = vpop.f32.mrf.mxu0
  %1174 = vmatprep.mubr.f32.mxu0 0.0
  %1175 = vmatmul.mubr.f32.gmra.mxu0 %v851
  %v1176 = vpop.f32.mrf.mxu0
  %v1177 = vadd.f32 %v746, %v1176
  %v1178 = vpop.f32.mrf.mxu0
  %1179 = vmatprep.mubr.f32.mxu0 0.0
  %1180 = vmatmul.mubr.f32.gmra.mxu0 %v854
  %v1181 = vpop.f32.mrf.mxu0
  %v1182 = vadd.f32 %v746, %v1181
  %v1183 = vpop.f32.mrf.mxu0
  %1184 = vmatprep.mubr.f32.mxu0 0.0
  %1185 = vmatmul.mubr.f32.gmra.mxu0 %v857
  %v1186 = vpop.f32.mrf.mxu0
  %v1187 = vadd.f32 %v746, %v1186
  %v1188 = vpop.f32.mrf.mxu0
  %1189 = vmatprep.mubr.f32.mxu0 0.0
  %1190 = vmatmul.mubr.f32.gmra.mxu0 %v860
  %v1191 = vpop.f32.mrf.mxu0
  %v1192 = vadd.f32 %v746, %v1191
  %v1193 = vpop.f32.mrf.mxu0
  %1194 = vmatprep.mubr.f32.mxu0 0.0
  %1195 = vmatmul.mubr.f32.gmra.mxu0 %v863
  %v1196 = vpop.f32.mrf.mxu0
  %v1197 = vadd.f32 %v746, %v1196
  %v1198 = vpop.f32.mrf.mxu0
  %1199 = vmatprep.mubr.f32.mxu0 0.0
  %1200 = vmatmul.mubr.f32.gmra.mxu0 %v866
  %v1201 = vpop.f32.mrf.mxu0
  %v1202 = vadd.f32 %v746, %v1201
  %v1203 = vpop.f32.mrf.mxu0
  %1204 = vmatprep.mubr.f32.mxu0 0.0
  %1205 = vmatmul.mubr.f32.gmra.mxu0 %v869
  %v1206 = vpop.f32.mrf.mxu0
  %v1207 = vadd.f32 %v746, %v1206
  %v1208 = vpop.f32.mrf.mxu0
  %1209 = vmatprep.mubr.f32.mxu0 0.0
  %1210 = vmatmul.mubr.f32.gmra.mxu0 %v872
  %v1211 = vpop.f32.mrf.mxu0
  %v1212 = vadd.f32 %v746, %v1211
  %v1213 = vpop.f32.mrf.mxu0
  %1214 = vmatprep.mubr.f32.mxu0 0.0
  %1215 = vmatmul.mubr.f32.gmra.mxu0 %v875
  %v1216 = vpop.f32.mrf.mxu0
  %v1217 = vadd.f32 %v746, %v1216
  %v1218 = vpop.f32.mrf.mxu0
  %1219 = vmatprep.mubr.f32.mxu0 0.0
  %1220 = vmatmul.mubr.f32.gmra.mxu0 %v878
  %v1221 = vpop.f32.mrf.mxu0
  %v1222 = vadd.f32 %v746, %v1221
  %v1223 = vpop.f32.mrf.mxu0
  %1224 = vmatprep.mubr.f32.mxu0 0.0
  %1225 = vmatmul.mubr.f32.gmra.mxu0 %v881
  %v1226 = vpop.f32.mrf.mxu0
  %v1227 = vadd.f32 %v746, %v1226
  %v1228 = vpop.f32.mrf.mxu0
  %1229 = vmatprep.mubr.f32.mxu0 0.0
  %1230 = vmatmul.mubr.f32.gmra.mxu0 %v884
  %v1231 = vpop.f32.mrf.mxu0
  %v1232 = vadd.f32 %v746, %v1231
  %v1233 = vpop.f32.mrf.mxu0
  %1234 = vmatprep.mubr.f32.mxu0 0.0
  %1235 = vmatmul.mubr.f32.gmra.mxu0 %v887
  %v1236 = vpop.f32.mrf.mxu0
  %v1237 = vadd.f32 %v746, %v1236
  %v1238 = vpop.f32.mrf.mxu0
  %1239 = vmatprep.mubr.f32.mxu0 0.0
  %1240 = vmatmul.mubr.f32.gmra.mxu0 %v890
  %v1241 = vpop.f32.mrf.mxu0
  %v1242 = vadd.f32 %v746, %v1241
  %v1243 = vpop.f32.mrf.mxu0
  %1244 = vmatprep.mubr.f32.mxu0 0.0
  %1245 = vmatmul.mubr.f32.gmra.mxu0 %v893
  %v1246 = vpop.f32.mrf.mxu0
  %v1247 = vadd.f32 %v746, %v1246
  %v1248 = vpop.f32.mrf.mxu0
  %1249 = vmatprep.mubr.f32.mxu0 0.0
  %1250 = vmatmul.mubr.f32.gmra.mxu0 %v896
  %v1251 = vpop.f32.mrf.mxu0
  %v1252 = vadd.f32 %v746, %v1251
  %v1253 = vpop.f32.mrf.mxu0
  %1254 = vmatprep.mubr.f32.mxu0 0.0
  %1255 = vmatmul.mubr.f32.gmra.mxu0 %v899
  %v1256 = vpop.f32.mrf.mxu0
  %v1257 = vadd.f32 %v746, %v1256
  %v1258 = vpop.f32.mrf.mxu0
  %1259 = vmatprep.mubr.f32.mxu0 0.0
  %1260 = vmatmul.mubr.f32.gmra.mxu0 %v902
  %v1261 = vpop.f32.mrf.mxu0
  %v1262 = vadd.f32 %v746, %v1261
  %v1263 = vpop.f32.mrf.mxu0
  %1264 = vmatprep.mubr.f32.mxu0 0.0
  %1265 = vmatmul.mubr.f32.gmra.mxu0 %v905
  %v1266 = vpop.f32.mrf.mxu0
  %v1267 = vadd.f32 %v746, %v1266
  %v1268 = vpop.f32.mrf.mxu0
  %1269 = vmatprep.mubr.f32.mxu0 0.0
  %1270 = vmatmul.mubr.f32.gmra.mxu0 %v908
  %v1271 = vpop.f32.mrf.mxu0
  %v1272 = vadd.f32 %v746, %v1271
  %v1273 = vpop.f32.mrf.mxu0
  %1274 = vmatprep.mubr.f32.mxu0 0.0
  %1275 = vmatmul.mubr.f32.gmra.mxu0 %v911
  %v1276 = vpop.f32.mrf.mxu0
  %v1277 = vadd.f32 %v746, %v1276
  %v1278 = vpop.f32.mrf.mxu0
  %1279 = vmatprep.mubr.f32.mxu0 0.0
  %1280 = vmatmul.mubr.f32.gmra.mxu0 %v914
  %v1281 = vpop.f32.mrf.mxu0
  %v1282 = vadd.f32 %v746, %v1281
  %v1283 = vpop.f32.mrf.mxu0
  %1284 = vmatprep.mubr.f32.mxu0 0.0
  %1285 = vmatmul.mubr.f32.gmra.mxu0 %v917
  %v1286 = vpop.f32.mrf.mxu0
  %v1287 = vadd.f32 %v746, %v1286
  %v1288 = vpop.f32.mrf.mxu0
  %1289 = vmatprep.mubr.f32.mxu0 0.0
  %1290 = vmatmul.mubr.f32.gmra.mxu0 %v920
  %v1291 = vpop.f32.mrf.mxu0
  %v1292 = vadd.f32 %v746, %v1291
  %v1293 = vpop.f32.mrf.mxu0
  %1294 = vmatprep.mubr.f32.mxu0 0.0
  %1295 = vmatmul.mubr.f32.gmra.mxu0 %v923
  %v1296 = vpop.f32.mrf.mxu0
  %v1297 = vadd.f32 %v746, %v1296
  %v1298 = vpop.f32.mrf.mxu0
  %1299 = vmatprep.mubr.f32.mxu0 0.0
  %1300 = vmatmul.mubr.f32.gmra.mxu0 %v926
  %v1301 = vpop.f32.mrf.mxu0
  %v1302 = vadd.f32 %v746, %v1301
  %v1303 = vpop.f32.mrf.mxu0
  %1304 = vmatprep.mubr.f32.mxu0 0.0
  %1305 = vmatmul.mubr.f32.gmra.mxu0 %v929
  %v1306 = vpop.f32.mrf.mxu0
  %v1307 = vadd.f32 %v746, %v1306
  %v1308 = vpop.f32.mrf.mxu0
  %1309 = vmatprep.mubr.f32.mxu0 0.0
  %1310 = vmatmul.mubr.f32.gmra.mxu0 %v932
  %v1311 = vpop.f32.mrf.mxu0
  %v1312 = vadd.f32 %v746, %v1311
  %v1313 = vpop.f32.mrf.mxu0
  %1314 = vmatprep.mubr.f32.mxu0 0.0
  %1315 = vmatmul.mubr.f32.gmra.mxu0 %v935
  %v1316 = vpop.f32.mrf.mxu0
  %v1317 = vadd.f32 %v746, %v1316
  %v1318 = vpop.f32.mrf.mxu0
  %1319 = vmatprep.mubr.f32.mxu0 0.0
  %1320 = vmatmul.mubr.f32.gmra.mxu0 %v938
  %v1321 = vpop.f32.mrf.mxu0
  %v1322 = vadd.f32 %v746, %v1321
  %v1323 = vpop.f32.mrf.mxu0
  %1324 = vdwg.mxu0
  %v1325 = vadd.f32 %v20, %v1007
  %v1326 = vadd.f32 %v21, %v1012
  %v1327 = vadd.f32 %v22, %v1017
  %v1328 = vadd.f32 %v23, %v1022
  %v1329 = vadd.f32 %v24, %v1027
  %v1330 = vadd.f32 %v25, %v1032
  %v1331 = vadd.f32 %v26, %v1037
  %v1332 = vadd.f32 %v27, %v1042
  %v1333 = vadd.f32 %v28, %v1047
  %v1334 = vadd.f32 %v29, %v1052
  %v1335 = vadd.f32 %v30, %v1057
  %v1336 = vadd.f32 %v31, %v1062
  %v1337 = vadd.f32 %v32, %v1067
  %v1338 = vadd.f32 %v33, %v1072
  %v1339 = vadd.f32 %v34, %v1077
  %v1340 = vadd.f32 %v35, %v1082
  %v1341 = vadd.f32 %v36, %v1087
  %v1342 = vadd.f32 %v37, %v1092
  %v1343 = vadd.f32 %v38, %v1097
  %v1344 = vadd.f32 %v39, %v1102
  %v1345 = vadd.f32 %v40, %v1107
  %v1346 = vadd.f32 %v41, %v1112
  %v1347 = vadd.f32 %v42, %v1117
  %v1348 = vadd.f32 %v43, %v1122
  %v1349 = vadd.f32 %v44, %v1127
  %v1350 = vadd.f32 %v45, %v1132
  %v1351 = vadd.f32 %v46, %v1137
  %v1352 = vadd.f32 %v47, %v1142
  %v1353 = vadd.f32 %v48, %v1147
  %v1354 = vadd.f32 %v49, %v1152
  %v1355 = vadd.f32 %v50, %v1157
  %v1356 = vadd.f32 %v51, %v1162
  %v1357 = vadd.f32 %v52, %v1167
  %v1358 = vadd.f32 %v53, %v1172
  %v1359 = vadd.f32 %v54, %v1177
  %v1360 = vadd.f32 %v55, %v1182
  %v1361 = vadd.f32 %v56, %v1187
  %v1362 = vadd.f32 %v57, %v1192
  %v1363 = vadd.f32 %v58, %v1197
  %v1364 = vadd.f32 %v59, %v1202
  %v1365 = vadd.f32 %v60, %v1207
  %v1366 = vadd.f32 %v61, %v1212
  %v1367 = vadd.f32 %v62, %v1217
  %v1368 = vadd.f32 %v63, %v1222
  %v1369 = vadd.f32 %v64, %v1227
  %v1370 = vadd.f32 %v65, %v1232
  %v1371 = vadd.f32 %v66, %v1237
  %v1372 = vadd.f32 %v67, %v1242
  %v1373 = vadd.f32 %v68, %v1247
  %v1374 = vadd.f32 %v69, %v1252
  %v1375 = vadd.f32 %v70, %v1257
  %v1376 = vadd.f32 %v71, %v1262
  %v1377 = vadd.f32 %v72, %v1267
  %v1378 = vadd.f32 %v73, %v1272
  %v1379 = vadd.f32 %v74, %v1277
  %v1380 = vadd.f32 %v75, %v1282
  %v1381 = vadd.f32 %v76, %v1287
  %v1382 = vadd.f32 %v77, %v1292
  %v1383 = vadd.f32 %v78, %v1297
  %v1384 = vadd.f32 %v79, %v1302
  %v1385 = vadd.f32 %v80, %v1307
  %v1386 = vadd.f32 %v81, %v1312
  %v1387 = vadd.f32 %v82, %v1317
  %v1388 = vadd.f32 %v83, %v1322
  %v1389 = vmax.f32 %v1325, 0.0
  %v1390 = vmax.f32 %v1326, 0.0
  %v1391 = vmax.f32 %v1327, 0.0
  %v1392 = vmax.f32 %v1328, 0.0
  %v1393 = vmax.f32 %v1329, 0.0
  %v1394 = vmax.f32 %v1330, 0.0
  %v1395 = vmax.f32 %v1331, 0.0
  %v1396 = vmax.f32 %v1332, 0.0
  %v1397 = vmax.f32 %v1333, 0.0
  %v1398 = vmax.f32 %v1334, 0.0
  %v1399 = vmax.f32 %v1335, 0.0
  %v1400 = vmax.f32 %v1336, 0.0
  %v1401 = vmax.f32 %v1337, 0.0
  %v1402 = vmax.f32 %v1338, 0.0
  %v1403 = vmax.f32 %v1339, 0.0
  %v1404 = vmax.f32 %v1340, 0.0
  %v1405 = vmax.f32 %v1341, 0.0
  %v1406 = vmax.f32 %v1342, 0.0
  %v1407 = vmax.f32 %v1343, 0.0
  %v1408 = vmax.f32 %v1344, 0.0
  %v1409 = vmax.f32 %v1345, 0.0
  %v1410 = vmax.f32 %v1346, 0.0
  %v1411 = vmax.f32 %v1347, 0.0
  %v1412 = vmax.f32 %v1348, 0.0
  %v1413 = vmax.f32 %v1349, 0.0
  %v1414 = vmax.f32 %v1350, 0.0
  %v1415 = vmax.f32 %v1351, 0.0
  %v1416 = vmax.f32 %v1352, 0.0
  %v1417 = vmax.f32 %v1353, 0.0
  %v1418 = vmax.f32 %v1354, 0.0
  %v1419 = vmax.f32 %v1355, 0.0
  %v1420 = vmax.f32 %v1356, 0.0
  %v1421 = vmax.f32 %v1357, 0.0
  %v1422 = vmax.f32 %v1358, 0.0
  %v1423 = vmax.f32 %v1359, 0.0
  %v1424 = vmax.f32 %v1360, 0.0
  %v1425 = vmax.f32 %v1361, 0.0
  %v1426 = vmax.f32 %v1362, 0.0
  %v1427 = vmax.f32 %v1363, 0.0
  %v1428 = vmax.f32 %v1364, 0.0
  %v1429 = vmax.f32 %v1365, 0.0
  %v1430 = vmax.f32 %v1366, 0.0
  %v1431 = vmax.f32 %v1367, 0.0
  %v1432 = vmax.f32 %v1368, 0.0
  %v1433 = vmax.f32 %v1369, 0.0
  %v1434 = vmax.f32 %v1370, 0.0
  %v1435 = vmax.f32 %v1371, 0.0
  %v1436 = vmax.f32 %v1372, 0.0
  %v1437 = vmax.f32 %v1373, 0.0
  %v1438 = vmax.f32 %v1374, 0.0
  %v1439 = vmax.f32 %v1375, 0.0
  %v1440 = vmax.f32 %v1376, 0.0
  %v1441 = vmax.f32 %v1377, 0.0
  %v1442 = vmax.f32 %v1378, 0.0
  %v1443 = vmax.f32 %v1379, 0.0
  %v1444 = vmax.f32 %v1380, 0.0
  %v1445 = vmax.f32 %v1381, 0.0
  %v1446 = vmax.f32 %v1382, 0.0
  %v1447 = vmax.f32 %v1383, 0.0
  %v1448 = vmax.f32 %v1384, 0.0
  %v1449 = vmax.f32 %v1385, 0.0
  %v1450 = vmax.f32 %v1386, 0.0
  %v1451 = vmax.f32 %v1387, 0.0
  %v1452 = vmax.f32 %v1388, 0.0
  %1453 = vst.msk [vmem:[%s5] sm:$0xff] %vm95, %v1389
  %1454 = vst.msk [vmem:[%s5 + $0x8] sm:$0xff] %vm95, %v1390
  %1455 = vst.msk [vmem:[%s5 + $0x10] sm:$0xff] %vm95, %v1391
  %1456 = vst.msk [vmem:[%s5 + $0x18] sm:$0xff] %vm95, %v1392
  %1457 = vst.msk [vmem:[%s5 + $0x20] sm:$0xff] %vm95, %v1393
  %1458 = vst.msk [vmem:[%s5 + $0x28] sm:$0xff] %vm95, %v1394
  %1459 = vst.msk [vmem:[%s5 + $0x30] sm:$0xff] %vm95, %v1395
  %1460 = vst.msk [vmem:[%s5 + $0x38] sm:$0xff] %vm95, %v1396
  %1461 = vst.msk [vmem:[%s5 + $0x40] sm:$0xff] %vm95, %v1397
  %1462 = vst.msk [vmem:[%s5 + $0x48] sm:$0xff] %vm95, %v1398
  %1463 = vst.msk [vmem:[%s5 + $0x50] sm:$0xff] %vm95, %v1399
  %1464 = vst.msk [vmem:[%s5 + $0x58] sm:$0xff] %vm95, %v1400
  %1465 = vst.msk [vmem:[%s5 + $0x60] sm:$0xff] %vm95, %v1401
  %1466 = vst.msk [vmem:[%s5 + $0x68] sm:$0xff] %vm95, %v1402
  %1467 = vst.msk [vmem:[%s5 + $0x70] sm:$0xff] %vm95, %v1403
  %1468 = vst.msk [vmem:[%s5 + $0x78] sm:$0xff] %vm95, %v1404
  %1469 = vst.msk [vmem:[%s5 + $0x80] sm:$0xff] %vm95, %v1405
  %1470 = vst.msk [vmem:[%s5 + $0x88] sm:$0xff] %vm95, %v1406
  %1471 = vst.msk [vmem:[%s5 + $0x90] sm:$0xff] %vm95, %v1407
  %1472 = vst.msk [vmem:[%s5 + $0x98] sm:$0xff] %vm95, %v1408
  %1473 = vst.msk [vmem:[%s5 + $0xa0] sm:$0xff] %vm95, %v1409
  %1474 = vst.msk [vmem:[%s5 + $0xa8] sm:$0xff] %vm95, %v1410
  %1475 = vst.msk [vmem:[%s5 + $0xb0] sm:$0xff] %vm95, %v1411
  %1476 = vst.msk [vmem:[%s5 + $0xb8] sm:$0xff] %vm95, %v1412
  %1477 = vst.msk [vmem:[%s5 + $0xc0] sm:$0xff] %vm95, %v1413
  %1478 = vst.msk [vmem:[%s5 + $0xc8] sm:$0xff] %vm95, %v1414
  %1479 = vst.msk [vmem:[%s5 + $0xd0] sm:$0xff] %vm95, %v1415
  %1480 = vst.msk [vmem:[%s5 + $0xd8] sm:$0xff] %vm95, %v1416
  %1481 = vst.msk [vmem:[%s5 + $0xe0] sm:$0xff] %vm95, %v1417
  %1482 = vst.msk [vmem:[%s5 + $0xe8] sm:$0xff] %vm95, %v1418
  %1483 = vst.msk [vmem:[%s5 + $0xf0] sm:$0xff] %vm95, %v1419
  %1484 = vst.msk [vmem:[%s5 + $0xf8] sm:$0xff] %vm95, %v1420
  %1485 = vst.msk [vmem:[%s5 + $0x100] sm:$0xff] %vm95, %v1421
  %1486 = vst.msk [vmem:[%s5 + $0x108] sm:$0xff] %vm95, %v1422
  %1487 = vst.msk [vmem:[%s5 + $0x110] sm:$0xff] %vm95, %v1423
  %1488 = vst.msk [vmem:[%s5 + $0x118] sm:$0xff] %vm95, %v1424
  %1489 = vst.msk [vmem:[%s5 + $0x120] sm:$0xff] %vm95, %v1425
  %1490 = vst.msk [vmem:[%s5 + $0x128] sm:$0xff] %vm95, %v1426
  %1491 = vst.msk [vmem:[%s5 + $0x130] sm:$0xff] %vm95, %v1427
  %1492 = vst.msk [vmem:[%s5 + $0x138] sm:$0xff] %vm95, %v1428
  %1493 = vst.msk [vmem:[%s5 + $0x140] sm:$0xff] %vm95, %v1429
  %1494 = vst.msk [vmem:[%s5 + $0x148] sm:$0xff] %vm95, %v1430
  %1495 = vst.msk [vmem:[%s5 + $0x150] sm:$0xff] %vm95, %v1431
  %1496 = vst.msk [vmem:[%s5 + $0x158] sm:$0xff] %vm95, %v1432
  %1497 = vst.msk [vmem:[%s5 + $0x160] sm:$0xff] %vm95, %v1433
  %1498 = vst.msk [vmem:[%s5 + $0x168] sm:$0xff] %vm95, %v1434
  %1499 = vst.msk [vmem:[%s5 + $0x170] sm:$0xff] %vm95, %v1435
  %1500 = vst.msk [vmem:[%s5 + $0x178] sm:$0xff] %vm95, %v1436
  %1501 = vst.msk [vmem:[%s5 + $0x180] sm:$0xff] %vm95, %v1437
  %1502 = vst.msk [vmem:[%s5 + $0x188] sm:$0xff] %vm95, %v1438
  %1503 = vst.msk [vmem:[%s5 + $0x190] sm:$0xff] %vm95, %v1439
  %1504 = vst.msk [vmem:[%s5 + $0x198] sm:$0xff] %vm95, %v1440
  %1505 = vst.msk [vmem:[%s5 + $0x1a0] sm:$0xff] %vm95, %v1441
  %1506 = vst.msk [vmem:[%s5 + $0x1a8] sm:$0xff] %vm95, %v1442
  %1507 = vst.msk [vmem:[%s5 + $0x1b0] sm:$0xff] %vm95, %v1443
  %1508 = vst.msk [vmem:[%s5 + $0x1b8] sm:$0xff] %vm95, %v1444
  %1509 = vst.msk [vmem:[%s5 + $0x1c0] sm:$0xff] %vm95, %v1445
  %1510 = vst.msk [vmem:[%s5 + $0x1c8] sm:$0xff] %vm95, %v1446
  %1511 = vst.msk [vmem:[%s5 + $0x1d0] sm:$0xff] %vm95, %v1447
  %1512 = vst.msk [vmem:[%s5 + $0x1d8] sm:$0xff] %vm95, %v1448
  %1513 = vst.msk [vmem:[%s5 + $0x1e0] sm:$0xff] %vm95, %v1449
  %1514 = vst.msk [vmem:[%s5 + $0x1e8] sm:$0xff] %vm95, %v1450
  %1515 = vst.msk [vmem:[%s5 + $0x1f0] sm:$0xff] %vm95, %v1451
  %1516 = vst.msk [vmem:[%s5 + $0x1f8] sm:$0xff] %vm95, %v1452
  // Predicated region
  $region22: #{tpu_custom_call.1} parent=0 // pred_check
    _
  $region23: #{tpu_custom_call.1} parent=0 // pred_check_branch
    %1518 = sbr.rel (0) target = $region25
  $region24: #{tpu_custom_call.1} parent=0 // pred_region
    _
  $region25: #{tpu_custom_call.1} parent=0 // pred_fallthru
    _
  // Predicated region
  $region26: #{tpu_custom_call.1} parent=0 // pred_check
    _
  $region27: #{tpu_custom_call.1} parent=0 // pred_check_branch
    %1520 = sbr.rel (0) target = $region29
  $region28: #{tpu_custom_call.1} parent=0 // pred_region
    _
  $region29: #{tpu_custom_call.1} parent=0 // pred_fallthru
    _

</llo_original>
